<compile_context>
chip_gen: v7x
topology: tpu7x:2x2x1
jax: 0.10.0
libtpu: 0.0.40
codegen_flags: <defaults>
</compile_context>

<pallas_src>
import functools
import math

import jax
import jax.numpy as jnp
import numpy as np
from jax import lax
from jax.experimental import pallas as pl
from jax.experimental.pallas import tpu as pltpu

_MIB = 1024 * 1024


# --------------------------- hardware-aware sizing --------------------------- #

def _tpu_vmem_bytes():
    """Physical per-core VMEM (128 MiB v5e/v6e, 64 MiB v7x); conservative fallback."""
    try:
        return int(pltpu.get_tpu_info().vmem_capacity_bytes)
    except Exception:
        return 64 * _MIB


def _vmem_limit(need_bytes):
    # Generation-aware scoped-VMEM limit: <= ~60% of physical (>= 40 MiB cap floor), never
    # below 32 MiB, and >= 4x the estimated block footprint so double-buffering has headroom.
    phys = _tpu_vmem_bytes()
    cap = max(int(0.6 * phys), 40 * _MIB)
    return int(min(cap, max(4 * int(need_bytes), 32 * _MIB)))


def _block_budget():
    # Target total pipelined-block footprint per grid step (double buffers + f32 temps).
    return _tpu_vmem_bytes() // 4            # ~16 MiB on v7x, ~32 MiB on v5e/v6e


def _pick_tile(dim, cap, align):
    """Largest tile <= cap that divides dim and is `align`-aligned; else the full dim."""
    if dim <= cap:
        return dim
    t = (cap // align) * align
    while t >= align:
        if dim % t == 0:
            return t
        t -= align
    # TODO(synk): for non-divisible dims, pad in the wrapper instead of taking the full dim.
    return dim


def _choose_nb(n_images, per_image_bytes, resident_bytes, budget_bytes):
    """Largest nb dividing N that fits the VMEM budget; keep >= 2 grid steps (v7x megacore)."""
    best = 1
    for nb in range(1, n_images + 1):
        if n_images % nb:
            continue
        steps = n_images // nb
        if n_images >= 2 and steps < 2:
            continue
        if resident_bytes + nb * per_image_bytes <= budget_bytes:
            best = nb
    return best


# --------------------------- QKV projection kernel --------------------------- #
# (Standalone projection is only used on the pooled path; the no-pool path fuses it.)

def _qkv_matmul_kernel(x_ref, w_ref, o_ref):
    o_ref[...] = jnp.dot(
        x_ref[...], w_ref[...], preferred_element_type=jnp.float32
    ).astype(o_ref.dtype)


def qkv_projection(x2d, w, *, tm_cap=256, tn_cap=512):
    # x2d: (N*P, C1), w: (C1, 3*C1)  (transposed nn.Linear weight; qkv_bias=False default).
    NP, C = x2d.shape
    C3 = w.shape[1]
    ib = x2d.dtype.itemsize
    tm = _pick_tile(NP, tm_cap, 8)       # row tile (sublane-aligned)
    tn = _pick_tile(C3, tn_cap, 128)     # col tile (lane-aligned)
    # TODO(synk): add a K grid axis with an f32 VMEM accumulator (P3 pattern) once C1 >= 1024.
    need = 2 * (tm * C + C * tn + tm * tn) * ib + tm * tn * 4
    cost = pl.CostEstimate(
        flops=2 * NP * C * C3,
        transcendentals=0,
        bytes_accessed=(NP * C + C * C3 + NP * C3) * ib,
    )
    return pl.pallas_call(
        _qkv_matmul_kernel,
        out_shape=jax.ShapeDtypeStruct((NP, C3), x2d.dtype),
        grid=(NP // tm, C3 // tn),
        in_specs=[
            pl.BlockSpec((tm, C), lambda i, j: (i, 0)),
            pl.BlockSpec((C, tn), lambda i, j: (0, j)),
        ],
        out_specs=pl.BlockSpec((tm, tn), lambda i, j: (i, j)),
        compiler_params=pltpu.CompilerParams(
            dimension_semantics=("parallel", "parallel"),
            vmem_limit_bytes=_vmem_limit(need),
        ),
        cost_estimate=cost,
    )(x2d, w)


# ------------------------------ Attention math ------------------------------ #

def _attend_head(q, k, v):
    # q is pre-scaled by 1/sqrt(d); q/k/v are in the compute dtype (bf16-friendly for the MXU),
    # scores/softmax/accumulation are f32.  No explicit k.T: dot_general contracts last dims.
    s = lax.dot_general(
        q, k, (((1,), (1,)), ((), ())), preferred_element_type=jnp.float32
    )
    m = jnp.max(s, axis=-1, keepdims=True)
    p = jnp.exp(s - m)
    l = jnp.sum(p, axis=-1, keepdims=True)
    o = jnp.dot(p.astype(v.dtype), v, preferred_element_type=jnp.float32)
    inv = pl.reciprocal(l, approx=True)      # EUP slot
    inv = inv * (2.0 - l * inv)              # one Newton step -> ~f32-exact reciprocal
    return o * inv                           # (Pq, d) f32


# ----------------------- Fused qkv + attention (no pool) --------------------- #

def _fused_qkv_attn_kernel(x_ref, w_ref, o_ref, *, heads, d, scale):
    # x_ref: (nb, P, C1) pipelined block; w_ref: (C1, 3*C1) resident; o_ref: (nb, P, C1) in the
    # final 'n p (m d)' layout.  qkv never leaves VMEM.
    # TODO(synk): for large P, switch to flash-style online softmax with a KV grid axis.
    nb, P, C = x_ref.shape
    c1 = heads * d
    w = w_ref[...]
    y_all = None
    if P % 8 == 0:
        # One big (nb*P, C1) x (C1, 3*C1) matmul keeps the MXU better fed.
        y_all = jnp.dot(
            x_ref[...].reshape(nb * P, C), w, preferred_element_type=jnp.float32
        ).astype(w.dtype)
    for b in range(nb):
        if y_all is not None:
            y = y_all[b * P:(b + 1) * P]
        else:
            y = jnp.dot(x_ref[b], w, preferred_element_type=jnp.float32).astype(w.dtype)
        for m in range(heads):
            q = y[:, m * d:(m + 1) * d] * scale          # fold 1/sqrt(d) into q (P*d muls)
            k = y[:, c1 + m * d:c1 + (m + 1) * d]
            v = y[:, 2 * c1 + m * d:2 * c1 + (m + 1) * d]
            # Immediate per-head store bounds live ranges (no concat).
            o_ref[b, :, m * d:(m + 1) * d] = _attend_head(q, k, v).astype(o_ref.dtype)


def fused_attention_no_pool(x, w, *, heads, d, out_dtype):
    # x: (N, P, C1) in compute dtype, w: (C1, 3*C1) in compute dtype -> (N, P, C1) in out_dtype.
    N, P, C = x.shape
    C3 = w.shape[1]
    c1 = heads * d
    assert C3 == 3 * c1 and C == c1
    scale = 1.0 / math.sqrt(d)
    ib = x.dtype.itemsize
    ob = jnp.dtype(out_dtype).itemsize

    resident = 2 * C * C3 * ib                              # weight buffers
    per_img = (2 * P * C * ib                               # x block (double-buffered)
               + 2 * P * c1 * ob                            # out block (double-buffered)
               + P * C3 * (4 + ib)                          # f32 matmul result + cast copy
               + 2 * P * P * 4                              # live f32 score matrices
               + P * c1 * 4)                                # per-head f32 output accumulators
    nb = _choose_nb(N, per_img, resident, _block_budget())
    need = resident + nb * per_img

    cost = pl.CostEstimate(
        flops=2 * N * P * C * C3 + 4 * N * heads * P * P * d,
        transcendentals=N * heads * P * P,
        bytes_accessed=(N * P * C + C * C3) * ib + N * P * c1 * ob,
    )
    kernel = functools.partial(_fused_qkv_attn_kernel, heads=heads, d=d, scale=scale)
    return pl.pallas_call(
        kernel,
        out_shape=jax.ShapeDtypeStruct((N, P, c1), out_dtype),
        grid=(N // nb,),
        in_specs=[
            pl.BlockSpec((nb, P, C), lambda i: (i, 0, 0)),
            pl.BlockSpec((C, C3), lambda i: (0, 0)),        # same block every step -> resident
        ],
        out_specs=pl.BlockSpec((nb, P, c1), lambda i: (i, 0, 0)),
        compiler_params=pltpu.CompilerParams(
            dimension_semantics=("parallel",),
            vmem_limit_bytes=_vmem_limit(need),
        ),
        cost_estimate=cost,
    )(x, w)


# ------------------------ Slab attention (pooled path) ----------------------- #

def _slab_attn_kernel(q_ref, kv_ref, o_ref, *, heads, d, scale):
    # q_ref: (nb, Pq, C1), kv_ref: (nb, Pk, 2*C1) — lane-dense slabs; heads sliced in-kernel.
    nb, Pq, c1 = q_ref.shape
    for b in range(nb):
        qb = q_ref[b]
        kvb = kv_ref[b]
        for m in range(heads):
            q = qb[:, m * d:(m + 1) * d] * scale
            k = kvb[:, m * d:(m + 1) * d]
            v = kvb[:, c1 + m * d:c1 + (m + 1) * d]
            o_ref[b, :, m * d:(m + 1) * d] = _attend_head(q, k, v).astype(o_ref.dtype)


def slab_attention(q_slab, kv_slab, *, heads, d, out_dtype):
    # q_slab: (N, Pq, C1), kv_slab: (N, Pk, 2*C1)  ->  (N, Pq, C1)
    N, Pq, c1 = q_slab.shape
    Pk = kv_slab.shape[1]
    scale = 1.0 / math.sqrt(d)
    ib = q_slab.dtype.itemsize
    ob = jnp.dtype(out_dtype).itemsize

    per_img = (2 * Pq * c1 * ib + 2 * Pk * 2 * c1 * ib + 2 * Pq * c1 * ob
               + 2 * Pq * Pk * 4 + Pq * c1 * 4)
    nb = _choose_nb(N, per_img, 0, _block_budget())
    need = nb * per_img

    cost = pl.CostEstimate(
        flops=4 * N * heads * Pq * Pk * d,
        transcendentals=N * heads * Pq * Pk,
        bytes_accessed=N * (Pq * c1 + Pk * 2 * c1) * ib + N * Pq * c1 * ob,
    )
    kernel = functools.partial(_slab_attn_kernel, heads=heads, d=d, scale=scale)
    return pl.pallas_call(
        kernel,
        out_shape=jax.ShapeDtypeStruct((N, Pq, c1), out_dtype),
        grid=(N // nb,),
        in_specs=[
            pl.BlockSpec((nb, Pq, c1), lambda i: (i, 0, 0)),
            pl.BlockSpec((nb, Pk, 2 * c1), lambda i: (i, 0, 0)),
        ],
        out_specs=pl.BlockSpec((nb, Pq, c1), lambda i: (i, 0, 0)),
        compiler_params=pltpu.CompilerParams(
            dimension_semantics=("parallel",),
            vmem_limit_bytes=_vmem_limit(need),
        ),
        cost_estimate=cost,
    )(q_slab, kv_slab)


# --------------------------------- JAX glue ---------------------------------- #

def maxpool2d_nhwc(x, k, s):
    # nn.MaxPool2d(k, s, (k-1)//2) applied in NHWC (channels stay in lanes); identity if k==1.
    if k <= 1:
        return x
    pad = (k - 1) // 2
    init = jnp.asarray(-jnp.inf, dtype=x.dtype)
    return lax.reduce_window(
        x, init, lax.max,
        window_dimensions=(1, k, k, 1),
        window_strides=(1, s, s, 1),
        padding=((0, 0), (pad, pad), (pad, pad), (0, 0)),
    )


def multi_scale_sa_v2(x, w_qkv, *, h, heads=2, k_q=1, k_kv=1, s_q=1, s_kv=1,
                      compute_dtype=jnp.bfloat16):
    """Forward pass of MultiScaleSAV2.

    x:      (N, P, C1) with P = h * w
    w_qkv:  (C1, 3*C1)   (transposed nn.Linear weight; qkv_bias=False is the module default)
    returns (N, P_q, C1) in x.dtype
    """
    n, p, c1 = x.shape
    w_sp = p // h
    assert h * w_sp == p and c1 % heads == 0
    d = c1 // heads
    out_dtype = x.dtype
    cdtype = jnp.dtype(compute_dtype) if compute_dtype is not None else x.dtype
    xc = x.astype(cdtype)
    wc = w_qkv.astype(cdtype)

    # TODO(synk): SDPA dropout (drop > 0 in training mode) is not implemented (drop=0.0 default).
    if k_q <= 1 and k_kv <= 1:
        # Default path: qkv projection fused into the attention kernel; no qkv HBM round trip.
        return fused_attention_no_pool(xc, wc, heads=heads, d=d, out_dtype=out_dtype)

    # Pooled path: projection kernel -> NHWC max-pool (per-channel op, lane-dense) -> slab attn.
    y = qkv_projection(xc.reshape(n * p, c1), wc)              # (N*P, 3*C1) in compute dtype
    y = y.reshape(n, h, w_sp, 3 * c1)
    q = maxpool2d_nhwc(y[..., :c1], k_q, s_q)                  # (n, hq, wq, C1)
    kv = maxpool2d_nhwc(y[..., c1:], k_kv, s_kv)               # (n, hk, wk, 2*C1)
    q = q.reshape(n, -1, c1)
    kv = kv.reshape(n, -1, 2 * c1)
    return slab_attention(q, kv, heads=heads, d=d, out_dtype=out_dtype)


# Pure-JAX reference (mirrors the PyTorch module exactly, NCHW pooling) for validation.
def _reference(x, w_qkv, *, h, heads, k_q, k_kv, s_q, s_kv):
    n, p, c1 = x.shape
    w_sp = p // h
    d = c1 // heads
    y = jnp.dot(x.reshape(n * p, c1), w_qkv, precision="highest")
    y = y.reshape(n, h, w_sp, 3, heads, d)
    y = jnp.transpose(y, (3, 0, 4, 5, 1, 2)).reshape(3, n * heads, d, h, w_sp)
    q, k, v = y[0], y[1], y[2]

    def pool_nchw(t, kk, ss):
        if kk <= 1:
            return t
        pad = (kk - 1) // 2
        return lax.reduce_window(
            t, jnp.asarray(-jnp.inf, t.dtype), lax.max,
            (1, 1, kk, kk), (1, 1, ss, ss),
            ((0, 0), (0, 0), (pad, pad), (pad, pad)))

    def flat(t):
        B, D, H2, W2 = t.shape
        return jnp.transpose(t, (0, 2, 3, 1)).reshape(B, H2 * W2, D)

    q = flat(pool_nchw(q, k_q, s_q))
    k = flat(pool_nchw(k, k_kv, s_kv))
    v = flat(pool_nchw(v, k_kv, s_kv))
    s = jnp.einsum("bqd,bkd->bqk", q, k, precision="highest") / math.sqrt(d)
    a = jax.nn.softmax(s, axis=-1)
    out = jnp.einsum("bqk,bkd->bqd", a, v, precision="highest")
    pq = out.shape[1]
    return jnp.transpose(out.reshape(n, heads, pq, d), (0, 2, 1, 3)).reshape(n, pq, heads * d)


if __name__ == "__main__":
    # Small config consistent with the module: c1=32, h=w=8 -> P=64, heads=2, N=2.
    N, H, W, C1, HEADS = 2, 8, 8, 32, 2
    P = H * W

    key = jax.random.PRNGKey(0)
    kx, kw = jax.random.split(key)
    x = jax.random.normal(kx, (N, P, C1), dtype=jnp.float32)
    # nn.Linear(c1, 3*c1, bias=False) weight, stored transposed as (in, out).
    w_qkv = jax.random.normal(kw, (C1, 3 * C1), dtype=jnp.float32) * (1.0 / math.sqrt(C1))

    ref = _reference(x, w_qkv, h=H, heads=HEADS, k_q=1, k_kv=1, s_q=1, s_kv=1)

    # 1) No-pool path, f32 MXU operands.
    out32 = multi_scale_sa_v2(x, w_qkv, h=H, heads=HEADS, compute_dtype=jnp.float32)
    out32 = jax.block_until_ready(out32)
    assert out32.shape == (N, P, C1), out32.shape
    np.testing.assert_allclose(np.asarray(out32), np.asarray(ref), rtol=2e-2, atol=2e-2)

    # 2) No-pool path, default bf16 MXU operands (performance mode) — looser tolerance.
    out_bf = multi_scale_sa_v2(x, w_qkv, h=H, heads=HEADS)
    out_bf = jax.block_until_ready(out_bf)
    np.testing.assert_allclose(np.asarray(out_bf), np.asarray(ref), rtol=6e-2, atol=6e-2)

    # 3) Pooled path (MaxPool2d on q and kv), f32 operands.
    out_p = multi_scale_sa_v2(x, w_qkv, h=H, heads=HEADS, k_q=3, k_kv=3, s_q=1, s_kv=2,
                              compute_dtype=jnp.float32)
    out_p = jax.block_until_ready(out_p)
    ref_p = _reference(x, w_qkv, h=H, heads=HEADS, k_q=3, k_kv=3, s_q=1, s_kv=2)
    assert out_p.shape == ref_p.shape, (out_p.shape, ref_p.shape)
    np.testing.assert_allclose(np.asarray(out_p), np.asarray(ref_p), rtol=2e-2, atol=2e-2)

    print("KERNEL_OK")
</pallas_src>

<mosaic_0001>
module attributes {stable_mosaic.version = 11 : i64} {
  func.func @_fused_qkv_attn_kernel(%arg0: i32, %arg1: memref<1x64x32xf32, #tpu.memory_space<vmem>>, %arg2: memref<32x96xf32, #tpu.memory_space<vmem>>, %arg3: memref<1x64x32xf32, #tpu.memory_space<vmem>>) attributes {dimension_semantics = [#tpu.dimension_semantics<parallel>], iteration_bounds = array<i64: 2>, scalar_prefetch = 0 : i64, scratch_operands = 0 : i64, tpu.core_type = #tpu.core_type<tc>, window_params = [{transform_indices = @transform_0, window_bounds = array<i64: 1, 64, 32>}, {pipeline_mode = #tpu.pipeline_mode<synchronous>, transform_indices = @transform_1, window_bounds = array<i64: 32, 96>}, {transform_indices = @transform_2, window_bounds = array<i64: 1, 64, 32>}]} {
    %c0 = arith.constant 0 : index
    %c0_0 = arith.constant 0 : index
    %0 = vector.load %arg2[%c0, %c0_0] : memref<32x96xf32, #tpu.memory_space<vmem>>, vector<32x96xf32>
    %c0_1 = arith.constant 0 : index
    %c0_2 = arith.constant 0 : index
    %c0_3 = arith.constant 0 : index
    %1 = vector.load %arg1[%c0_1, %c0_2, %c0_3] : memref<1x64x32xf32, #tpu.memory_space<vmem>>, vector<1x64x32xf32>
    %2 = vector.shape_cast %1 : vector<1x64x32xf32> to vector<64x32xf32>
    %cst = arith.constant dense<0.000000e+00> : vector<64x96xf32>
    %3 = tpu.matmul %2, %0, %cst {dimension_numbers = #tpu.dot_dimension_numbers<[1], [0], [0], [1], [0, 0, 1, 1], [], []>} : vector<64x32xf32>, vector<32x96xf32>, vector<64x96xf32> -> vector<64x96xf32>
    %4 = vector.extract_strided_slice %3 {offsets = [0, 0], sizes = [64, 16], strides = [1, 1]} : vector<64x96xf32> to vector<64x16xf32>
    %cst_4 = arith.constant 2.500000e-01 : f32
    %5 = vector.broadcast %cst_4 : f32 to vector<64x16xf32>
    %6 = arith.mulf %4, %5 : vector<64x16xf32>
    %7 = vector.extract_strided_slice %3 {offsets = [0, 32], sizes = [64, 16], strides = [1, 1]} : vector<64x96xf32> to vector<64x16xf32>
    %8 = vector.extract_strided_slice %3 {offsets = [0, 64], sizes = [64, 16], strides = [1, 1]} : vector<64x96xf32> to vector<64x16xf32>
    %cst_5 = arith.constant dense<0.000000e+00> : vector<64x64xf32>
    %9 = tpu.matmul %6, %7, %cst_5 {dimension_numbers = #tpu.dot_dimension_numbers<[1], [1], [0], [0], [0, 0, 1, 0], [], []>} : vector<64x16xf32>, vector<64x16xf32>, vector<64x64xf32> -> vector<64x64xf32>
    %cst_6 = arith.constant dense<0xFF800000> : vector<64xf32>
    %10 = vector.multi_reduction <maximumf>, %9, %cst_6 [1] : vector<64x64xf32> to vector<64xf32>
    %11 = vector.shape_cast %10 : vector<64xf32> to vector<64x1xf32>
    %12 = vector.broadcast %11 : vector<64x1xf32> to vector<64x64xf32>
    %13 = arith.subf %9, %12 : vector<64x64xf32>
    %14 = math.exp %13 : vector<64x64xf32>
    %cst_7 = arith.constant dense<0.000000e+00> : vector<64xf32>
    %15 = vector.multi_reduction <add>, %14, %cst_7 [1] : vector<64x64xf32> to vector<64xf32>
    %16 = vector.shape_cast %15 : vector<64xf32> to vector<64x1xf32>
    %cst_8 = arith.constant dense<0.000000e+00> : vector<64x16xf32>
    %17 = tpu.matmul %14, %8, %cst_8 {dimension_numbers = #tpu.dot_dimension_numbers<[1], [0], [0], [1], [0, 0, 1, 1], [], []>} : vector<64x64xf32>, vector<64x16xf32>, vector<64x16xf32> -> vector<64x16xf32>
    %18 = tpu.reciprocal %16 {approx = true} : vector<64x1xf32> -> vector<64x1xf32>
    %19 = arith.mulf %16, %18 : vector<64x1xf32>
    %cst_9 = arith.constant 2.000000e+00 : f32
    %20 = vector.broadcast %cst_9 : f32 to vector<64x1xf32>
    %21 = arith.subf %20, %19 : vector<64x1xf32>
    %22 = arith.mulf %18, %21 : vector<64x1xf32>
    %23 = vector.broadcast %22 : vector<64x1xf32> to vector<64x16xf32>
    %24 = arith.mulf %17, %23 : vector<64x16xf32>
    %c0_10 = arith.constant 0 : index
    %c0_11 = arith.constant 0 : index
    %c0_12 = arith.constant 0 : index
    %25 = vector.load %arg3[%c0_10, %c0_11, %c0_12] : memref<1x64x32xf32, #tpu.memory_space<vmem>>, vector<1x64x16xf32>
    %26 = vector.shape_cast %25 : vector<1x64x16xf32> to vector<64x16xf32>
    %27 = vector.shape_cast %24 : vector<64x16xf32> to vector<1x64x16xf32>
    tpu.vector_store %arg3[%c0_10, %c0_11, %c0_12], %27 {strides = array<i32>} : memref<1x64x32xf32, #tpu.memory_space<vmem>>, vector<1x64x16xf32>,
    %28 = vector.extract_strided_slice %3 {offsets = [0, 16], sizes = [64, 16], strides = [1, 1]} : vector<64x96xf32> to vector<64x16xf32>
    %cst_13 = arith.constant 2.500000e-01 : f32
    %29 = vector.broadcast %cst_13 : f32 to vector<64x16xf32>
    %30 = arith.mulf %28, %29 : vector<64x16xf32>
    %31 = vector.extract_strided_slice %3 {offsets = [0, 48], sizes = [64, 16], strides = [1, 1]} : vector<64x96xf32> to vector<64x16xf32>
    %32 = vector.extract_strided_slice %3 {offsets = [0, 80], sizes = [64, 16], strides = [1, 1]} : vector<64x96xf32> to vector<64x16xf32>
    %cst_14 = arith.constant dense<0.000000e+00> : vector<64x64xf32>
    %33 = tpu.matmul %30, %31, %cst_14 {dimension_numbers = #tpu.dot_dimension_numbers<[1], [1], [0], [0], [0, 0, 1, 0], [], []>} : vector<64x16xf32>, vector<64x16xf32>, vector<64x64xf32> -> vector<64x64xf32>
    %cst_15 = arith.constant dense<0xFF800000> : vector<64xf32>
    %34 = vector.multi_reduction <maximumf>, %33, %cst_15 [1] : vector<64x64xf32> to vector<64xf32>
    %35 = vector.shape_cast %34 : vector<64xf32> to vector<64x1xf32>
    %36 = vector.broadcast %35 : vector<64x1xf32> to vector<64x64xf32>
    %37 = arith.subf %33, %36 : vector<64x64xf32>
    %38 = math.exp %37 : vector<64x64xf32>
    %cst_16 = arith.constant dense<0.000000e+00> : vector<64xf32>
    %39 = vector.multi_reduction <add>, %38, %cst_16 [1] : vector<64x64xf32> to vector<64xf32>
    %40 = vector.shape_cast %39 : vector<64xf32> to vector<64x1xf32>
    %cst_17 = arith.constant dense<0.000000e+00> : vector<64x16xf32>
    %41 = tpu.matmul %38, %32, %cst_17 {dimension_numbers = #tpu.dot_dimension_numbers<[1], [0], [0], [1], [0, 0, 1, 1], [], []>} : vector<64x64xf32>, vector<64x16xf32>, vector<64x16xf32> -> vector<64x16xf32>
    %42 = tpu.reciprocal %40 {approx = true} : vector<64x1xf32> -> vector<64x1xf32>
    %43 = arith.mulf %40, %42 : vector<64x1xf32>
    %cst_18 = arith.constant 2.000000e+00 : f32
    %44 = vector.broadcast %cst_18 : f32 to vector<64x1xf32>
    %45 = arith.subf %44, %43 : vector<64x1xf32>
    %46 = arith.mulf %42, %45 : vector<64x1xf32>
    %47 = vector.broadcast %46 : vector<64x1xf32> to vector<64x16xf32>
    %48 = arith.mulf %41, %47 : vector<64x16xf32>
    %c0_19 = arith.constant 0 : index
    %c0_20 = arith.constant 0 : index
    %c16 = arith.constant 16 : index
    %49 = vector.load %arg3[%c0_19, %c0_20, %c16] : memref<1x64x32xf32, #tpu.memory_space<vmem>>, vector<1x64x16xf32>
    %50 = vector.shape_cast %49 : vector<1x64x16xf32> to vector<64x16xf32>
    %51 = vector.shape_cast %48 : vector<64x16xf32> to vector<1x64x16xf32>
    tpu.vector_store %arg3[%c0_19, %c0_20, %c16], %51 {strides = array<i32>} : memref<1x64x32xf32, #tpu.memory_space<vmem>>, vector<1x64x16xf32>,
    return
  }
  func.func @transform_0(%arg0: i32) -> (i32, i32, i32) {
    %c0_i32 = arith.constant 0 : i32
    %c0_i32_0 = arith.constant 0 : i32
    %c0_i32_1 = arith.constant 0 : i32
    return %arg0, %c0_i32, %c0_i32_0 : i32, i32, i32
  }
  func.func @transform_1(%arg0: i32) -> (i32, i32) {
    %c0_i32 = arith.constant 0 : i32
    %c0_i32_0 = arith.constant 0 : i32
    %c0_i32_1 = arith.constant 0 : i32
    return %c0_i32, %c0_i32_0 : i32, i32
  }
  func.func @transform_2(%arg0: i32) -> (i32, i32, i32) {
    %c0_i32 = arith.constant 0 : i32
    %c0_i32_0 = arith.constant 0 : i32
    %c0_i32_1 = arith.constant 0 : i32
    return %arg0, %c0_i32, %c0_i32_0 : i32, i32, i32
  }
}

</mosaic_0001>

<llo_original>
// kernel: tpu_custom_call.1
$region0: #{tpu_custom_call.1}
  #allocation0 [shape = 'u32[]', space=smem, size = 0x4, offset = 0x4, fixed_abs, tag = 'smem constant byte address 0x4 - core index']
  #allocation1 [shape = 'u32[144,128]{1,0:T(1,128)}', space=vmem, size = 0x12000, scoped, tag = 'internal scratch']
  %s0 = inlined_call_operand.vmem [shape: f32[2,64,32], index: 0, kind: input, shape index: {}]
  %s1 = inlined_call_operand.vmem [shape: f32[32,96], index: 1, kind: input, shape index: {}]
  %s2 = inlined_call_operand.vmem [shape: f32[2,64,32], index: 2, kind: output, shape index: {}]
  %s3 = sld [smem:[#allocation0]]
  $region41: #{tpu_custom_call.1} parent=0
    _
  %s5 = ssub.s32 1, %s3
  %s6 = scalar_select 0, %s5, %s3
  loop: start=0, step=1, limit=4
  $region2: #{tpu_custom_call.1} parent=0 // loop_pre_header
    _
  $region3: #{tpu_custom_call.1} parent=0 // loop_header
    %s8 = sphi 0, %s12
    %p9 = scmp.ge.s32.totalorder %s8, 4
    %s18 = sphi 0, %s20
    %s21 = sphi 0, %s18
    %s22 = sphi 0, %s21
    %s38 = sphi 0, %s22
    %s42 = sphi 0, %s42
    %s44 = sphi 0, %s42
    %s45 = sphi 0, %s44
    %s59 = sphi 0, %s45
    %s65 = sphi 0, %s67
    %s68 = sphi 0, %s65
    %s69 = sphi 0, %s68
    %s85 = sphi 0, %s69
  $region4: #{tpu_custom_call.1} parent=0 // loop_header_branch
    %11 = sbr.rel (%p9) target = $region8
  $region5: #{tpu_custom_call.1} parent=0 // loop_body
    %s13 = ssub.s32 %s8, 1
    %s14 = ssub.s32 %s8, 2
    %s15 = sadd.s32 %s8, 1
    %s16 = ssub.s32 %s8, %s15
    %p17 = scmp.eq.s32.totalorder %s16, 0
    %s19 = sadd.s32 %s18, 1
    %s20 = scalar_select %p17, %s18, %s19
    %p23 = pneg %p17
    %p24 = scmp.eq.s32.totalorder %s8, 1
    %p25 = por %p23, %p24
    %p26 = scmp.ne.s32.totalorder %s18, %s21
    %p27 = scmp.eq.s32.totalorder %s8, 0
    %p28 = por %p26, %p27
    %p29 = scmp.ne.s32.totalorder %s18, %s21
    %p30 = scmp.eq.s32.totalorder %s13, 1
    %p31 = por %p29, %p30
    %p32 = scmp.ne.s32.totalorder %s21, %s22
    %p33 = scmp.eq.s32.totalorder %s13, 0
    %p34 = por %p32, %p33
    %p35 = scmp.ne.s32.totalorder %s21, %s22
    %p36 = scmp.eq.s32.totalorder %s14, 1
    %p37 = por %p35, %p36
    %p39 = scmp.ne.s32.totalorder %s22, %s38
    %p40 = scmp.eq.s32.totalorder %s14, 0
    %p41 = por %p39, %p40
    %s43 = sadd.s32 %s42, 1
    %p46 = scmp.eq.s32.totalorder %s8, 1
    %p47 = scmp.ne.s32.totalorder %s42, %s44
    %p48 = scmp.eq.s32.totalorder %s8, 0
    %p49 = por %p47, %p48
    %p50 = scmp.ne.s32.totalorder %s42, %s44
    %p51 = scmp.eq.s32.totalorder %s13, 1
    %p52 = por %p50, %p51
    %p53 = scmp.ne.s32.totalorder %s44, %s45
    %p54 = scmp.eq.s32.totalorder %s13, 0
    %p55 = por %p53, %p54
    %p56 = scmp.ne.s32.totalorder %s44, %s45
    %p57 = scmp.eq.s32.totalorder %s14, 1
    %p58 = por %p56, %p57
    %p60 = scmp.ne.s32.totalorder %s45, %s59
    %p61 = scmp.eq.s32.totalorder %s14, 0
    %p62 = por %p60, %p61
    %s63 = ssub.s32 %s8, %s15
    %p64 = scmp.eq.s32.totalorder %s63, 0
    %s66 = sadd.s32 %s65, 1
    %s67 = scalar_select %p64, %s65, %s66
    %p70 = pneg %p64
    %p71 = scmp.eq.s32.totalorder %s8, 1
    %p72 = por %p70, %p71
    %p73 = scmp.ne.s32.totalorder %s65, %s68
    %p74 = scmp.eq.s32.totalorder %s8, 0
    %p75 = por %p73, %p74
    %p76 = scmp.ne.s32.totalorder %s65, %s68
    %p77 = scmp.eq.s32.totalorder %s13, 1
    %p78 = por %p76, %p77
    %p79 = scmp.ne.s32.totalorder %s68, %s69
    %p80 = scmp.eq.s32.totalorder %s13, 0
    %p81 = por %p79, %p80
    %p82 = scmp.ne.s32.totalorder %s68, %s69
    %p83 = scmp.eq.s32.totalorder %s14, 1
    %p84 = por %p82, %p83
    %p86 = scmp.ne.s32.totalorder %s69, %s85
    %p87 = scmp.eq.s32.totalorder %s14, 0
    %p88 = por %p86, %p87
    %p89 = scmp.le.s32.totalorder 1, %s8
    %p90 = scmp.lt.s32.totalorder %s8, 3
    %p91 = pnand %p89, %p90
    %p92 = pneg %p91
    // Predicated region
    $region9: #{tpu_custom_call.1} parent=5 // pred_check
      _
    $region10: #{tpu_custom_call.1} parent=5 // pred_check_branch
      %94 = sbr.rel (%p91) target = $region12
    $region11: #{tpu_custom_call.1} parent=5 // pred_region
      %s95 = ssub.s32 %s8, 1
      // Predicated region
      $region13: #{tpu_custom_call.1} parent=11 // pred_check
        %p96 = pneg %p55
      $region14: #{tpu_custom_call.1} parent=11 // pred_check_branch
        %98 = sbr.rel (%p96) target = $region16
      $region15: #{tpu_custom_call.1} parent=11 // pred_region
        _
      $region16: #{tpu_custom_call.1} parent=11 // pred_fallthru
        _
    $region12: #{tpu_custom_call.1} parent=5 // pred_fallthru
      _
    %p99 = scmp.lt.s32.totalorder %s8, 2
    // Predicated region
    $region17: #{tpu_custom_call.1} parent=5 // pred_check
      %p100 = pneg %p99
    $region18: #{tpu_custom_call.1} parent=5 // pred_check_branch
      %102 = sbr.rel (%p100) target = $region20
    $region19: #{tpu_custom_call.1} parent=5 // pred_region
      // Predicated region
      $region21: #{tpu_custom_call.1} parent=19 // pred_check
        %p103 = pneg %p28
      $region22: #{tpu_custom_call.1} parent=19 // pred_check_branch
        %105 = sbr.rel (%p103) target = $region24
      $region23: #{tpu_custom_call.1} parent=19 // pred_region
        %p106 = scmp.lt.s32.totalorder %s8, 1
        %s107 = scalar_select %p106, %s8, 1
        %s108 = smul.addr %s107, 8
        %s109 = smul.addr %s108, 8
        %s110 = scalar_lea.vmem %s0, %s109
      $region24: #{tpu_custom_call.1} parent=19 // pred_fallthru
        _
    $region20: #{tpu_custom_call.1} parent=5 // pred_fallthru
      _
    %p111 = scmp.le.s32.totalorder 1, %s8
    %p112 = scmp.lt.s32.totalorder %s8, 3
    %p113 = pnand %p111, %p112
    %p114 = pneg %p113
    // Predicated region
    $region25: #{tpu_custom_call.1} parent=5 // pred_check
      _
    $region26: #{tpu_custom_call.1} parent=5 // pred_check_branch
      %116 = sbr.rel (%p113) target = $region28
    $region27: #{tpu_custom_call.1} parent=5 // pred_region
      %s117 = ssub.s32 %s8, 1
      %p118 = scmp.lt.s32.totalorder %s13, 1
      %s119 = scalar_select %p118, %s13, 1
      %s120 = smul.addr %s119, 8
      %s121 = smul.addr %s120, 8
      %s122 = scalar_lea.vmem %s0, %s121
      %p123 = pneg %p34
      %p124 = pneg %p31
      %p125 = pneg %p55
      %p126 = pneg %p52
      %p127 = pneg %p81
      %p128 = pneg %p78
      %p129 = scmp.lt.s32.totalorder %s13, 1
      %s130 = scalar_select %p129, %s13, 1
      %s131 = smul.addr %s130, 8
      %s132 = smul.addr %s131, 8
      %s133 = scalar_lea.vmem %s2, %s132
      %p134 = scmp.lt.s32.totalorder %s13, 1
      %s135 = scalar_select %p134, %s13, 1
      %s136 = smul.addr %s135, 8
      %s137 = smul.addr %s136, 8
      %s138 = scalar_lea.vmem %s0, %s137
      %p139 = scmp.lt.s32.totalorder %s13, 1
      %s140 = scalar_select %p139, %s13, 1
      %s141 = smul.addr %s140, 8
      %s142 = smul.addr %s141, 8
      %s143 = scalar_lea.vmem %s2, %s142
      %v144 = vld [vmem:[%s1] sm:$0xff]
      %v145 = vld [vmem:[%s1 + $0x8] sm:$0xff]
      %v146 = vld [vmem:[%s1 + $0x10] sm:$0xff]
      %v147 = vld [vmem:[%s1 + $0x18] sm:$0xff]
      %v148 = vld [vmem:[%s138] sm:$0xff]
      %v149 = vld [vmem:[%s138 + $0x8] sm:$0xff]
      %v150 = vld [vmem:[%s138 + $0x10] sm:$0xff]
      %v151 = vld [vmem:[%s138 + $0x18] sm:$0xff]
      %v152 = vld [vmem:[%s138 + $0x20] sm:$0xff]
      %v153 = vld [vmem:[%s138 + $0x28] sm:$0xff]
      %v154 = vld [vmem:[%s138 + $0x30] sm:$0xff]
      %v155 = vld [vmem:[%s138 + $0x38] sm:$0xff]
      %vm156 = vcmask 261120
      %v158 = vsel %vm156, %v148, 0
      %v161 = vsel %vm156, %v149, 0
      %v164 = vsel %vm156, %v150, 0
      %v167 = vsel %vm156, %v151, 0
      %v170 = vsel %vm156, %v152, 0
      %v173 = vsel %vm156, %v153, 0
      %v176 = vsel %vm156, %v154, 0
      %v179 = vsel %vm156, %v155, 0
      %181 = vmatprep.subr.mxu0 0.0
      %182 = vmatpush1.msra.mxu0 %v144
      %183 = vmatprep.subr.mxu0 0.0
      %184 = vmatpush1.msra.mxu0 %v145
      %185 = vmatprep.subr.mxu0 0.0
      %186 = vmatpush1.msra.mxu0 %v146
      %187 = vmatprep.subr.mxu0 0.0
      %188 = vmatpush1.msra.mxu0 %v147
      %189 = vmatprep.subr.mxu0 0.0
      %190 = vmatpush1.msra.mxu0 0.0
      %191 = vmatprep.subr.mxu0 0.0
      %192 = vmatpush1.msra.mxu0 0.0
      %193 = vmatprep.subr.mxu0 0.0
      %194 = vmatpush1.msra.mxu0 0.0
      %195 = vmatprep.subr.mxu0 0.0
      %196 = vmatpush1.msra.mxu0 0.0
      %197 = vmatprep.subr.mxu0 0.0
      %198 = vmatpush1.msra.mxu0 0.0
      %199 = vmatprep.subr.mxu0 0.0
      %200 = vmatpush1.msra.mxu0 0.0
      %201 = vmatprep.subr.mxu0 0.0
      %202 = vmatpush1.msra.mxu0 0.0
      %203 = vmatprep.subr.mxu0 0.0
      %204 = vmatpush1.msra.mxu0 0.0
      %205 = vmatprep.subr.mxu0 0.0
      %206 = vmatpush1.msra.mxu0 0.0
      %207 = vmatprep.subr.mxu0 0.0
      %208 = vmatpush1.msra.mxu0 0.0
      %209 = vmatprep.subr.mxu0 0.0
      %210 = vmatpush1.msra.mxu0 0.0
      %211 = vmatprep.subr.mxu0 0.0
      %212 = vmatpush1.msra.mxu0 0.0
      %213 = vmatprep.subr.mxu0 0.0
      %214 = vmatpush1.msra.mxu0 0.0
      %215 = vmatprep.subr.mxu0 0.0
      %216 = vmatpush1.msra.mxu0 0.0
      %217 = vmatprep.subr.mxu0 0.0
      %218 = vmatpush1.msra.mxu0 0.0
      %219 = vmatprep.subr.mxu0 0.0
      %220 = vmatpush1.msra.mxu0 0.0
      %221 = vmatprep.subr.mxu0 0.0
      %222 = vmatpush1.msra.mxu0 0.0
      %223 = vmatprep.subr.mxu0 0.0
      %224 = vmatpush1.msra.mxu0 0.0
      %225 = vmatprep.subr.mxu0 0.0
      %226 = vmatpush1.msra.mxu0 0.0
      %227 = vmatprep.subr.mxu0 0.0
      %228 = vmatpush1.msra.mxu0 0.0
      %229 = vmatprep.subr.mxu0 0.0
      %230 = vmatpush1.msra.mxu0 0.0
      %231 = vmatprep.subr.mxu0 0.0
      %232 = vmatpush1.msra.mxu0 0.0
      %233 = vmatprep.subr.mxu0 0.0
      %234 = vmatpush1.msra.mxu0 0.0
      %235 = vmatprep.subr.mxu0 0.0
      %236 = vmatpush1.msra.mxu0 0.0
      %237 = vmatprep.subr.mxu0 0.0
      %238 = vmatpush1.msra.mxu0 0.0
      %239 = vmatprep.subr.mxu0 0.0
      %240 = vmatpush1.msra.mxu0 0.0
      %241 = vmatprep.subr.mxu0 0.0
      %242 = vmatpush1.msra.mxu0 0.0
      %243 = vmatprep.subr.mxu0 0.0
      %244 = vmatpush1.msra.mxu0 0.0
      %245 = vmatprep.mubr.f32.mxu0 0.0
      %246 = vmatmul.mubr.f32.gmra.mrb[0].mxu0 %v158
      %v247 = vpop.f32.mrb[0].mxu0
      %v248 = vadd.f32 0.0, %v247
      %v249 = vpop.f32.mrb[0].mxu0
      %250 = vmatprep.mubr.f32.mxu0 0.0
      %251 = vmatmul.mubr.f32.gmra.mrb[0].mxu0 %v161
      %v252 = vpop.f32.mrb[0].mxu0
      %v253 = vadd.f32 0.0, %v252
      %v254 = vpop.f32.mrb[0].mxu0
      %255 = vmatprep.mubr.f32.mxu0 0.0
      %256 = vmatmul.mubr.f32.gmra.mrb[0].mxu0 %v164
      %v257 = vpop.f32.mrb[0].mxu0
      %v258 = vadd.f32 0.0, %v257
      %v259 = vpop.f32.mrb[0].mxu0
      %260 = vmatprep.mubr.f32.mxu0 0.0
      %261 = vmatmul.mubr.f32.gmra.mrb[0].mxu0 %v167
      %v262 = vpop.f32.mrb[0].mxu0
      %v263 = vadd.f32 0.0, %v262
      %v264 = vpop.f32.mrb[0].mxu0
      %265 = vmatprep.mubr.f32.mxu0 0.0
      %266 = vmatmul.mubr.f32.gmra.mrb[0].mxu0 %v170
      %v267 = vpop.f32.mrb[0].mxu0
      %v268 = vadd.f32 0.0, %v267
      %v269 = vpop.f32.mrb[0].mxu0
      %270 = vmatprep.mubr.f32.mxu0 0.0
      %271 = vmatmul.mubr.f32.gmra.mrb[0].mxu0 %v173
      %v272 = vpop.f32.mrb[0].mxu0
      %v273 = vadd.f32 0.0, %v272
      %v274 = vpop.f32.mrb[0].mxu0
      %275 = vmatprep.mubr.f32.mxu0 0.0
      %276 = vmatmul.mubr.f32.gmra.mrb[0].mxu0 %v176
      %v277 = vpop.f32.mrb[0].mxu0
      %v278 = vadd.f32 0.0, %v277
      %v279 = vpop.f32.mrb[0].mxu0
      %280 = vmatprep.mubr.f32.mxu0 0.0
      %281 = vmatmul.mubr.f32.gmra.mrb[0].mxu0 %v179
      %v282 = vpop.f32.mrb[0].mxu0
      %v283 = vadd.f32 0.0, %v282
      %v284 = vpop.f32.mrb[0].mxu0
      %285 = vdwg.mxu0
      %v286 = vmul.f32 %v248, 0.25
      %v287 = vmul.f32 %v253, 0.25
      %v288 = vmul.f32 %v258, 0.25
      %v289 = vmul.f32 %v263, 0.25
      %v290 = vmul.f32 %v268, 0.25
      %v291 = vmul.f32 %v273, 0.25
      %v292 = vmul.f32 %v278, 0.25
      %v293 = vmul.f32 %v283, 0.25
      %302 = vrot.lane.b32.xlu0 %v248, 96
      %v303 = vpop.permute.xlu0 %302
      %304 = vrot.lane.b32.xlu0 %v253, 96
      %v305 = vpop.permute.xlu0 %304
      %306 = vrot.lane.b32.xlu0 %v258, 96
      %v307 = vpop.permute.xlu0 %306
      %308 = vrot.lane.b32.xlu0 %v263, 96
      %v309 = vpop.permute.xlu0 %308
      %310 = vrot.lane.b32.xlu0 %v268, 96
      %v311 = vpop.permute.xlu0 %310
      %312 = vrot.lane.b32.xlu0 %v273, 96
      %v313 = vpop.permute.xlu0 %312
      %314 = vrot.lane.b32.xlu0 %v278, 96
      %v315 = vpop.permute.xlu0 %314
      %316 = vrot.lane.b32.xlu0 %v283, 96
      %v317 = vpop.permute.xlu0 %316
      %vm318 = vcmask 130048
      %v320 = vsel %vm318, %v286, 0
      %v323 = vsel %vm318, %v287, 0
      %v326 = vsel %vm318, %v288, 0
      %v329 = vsel %vm318, %v289, 0
      %v332 = vsel %vm318, %v290, 0
      %v335 = vsel %vm318, %v291, 0
      %v338 = vsel %vm318, %v292, 0
      %v341 = vsel %vm318, %v293, 0
      %v343 = vsel %vm318, %v303, 0
      %v345 = vsel %vm318, %v305, 0
      %v347 = vsel %vm318, %v307, 0
      %v349 = vsel %vm318, %v309, 0
      %v351 = vsel %vm318, %v311, 0
      %v353 = vsel %vm318, %v313, 0
      %v355 = vsel %vm318, %v315, 0
      %v357 = vsel %vm318, %v317, 0
      %359 = vmatprep.subr.mxu0 0.0
      %360 = vmatpush1.xpose.msra.mxu0 %v343
      %361 = vmatprep.subr.mxu0 0.0
      %362 = vmatpush1.xpose.msra.mxu0 %v345
      %363 = vmatprep.subr.mxu0 0.0
      %364 = vmatpush1.xpose.msra.mxu0 %v347
      %365 = vmatprep.subr.mxu0 0.0
      %366 = vmatpush1.xpose.msra.mxu0 %v349
      %367 = vmatprep.subr.mxu0 0.0
      %368 = vmatpush1.xpose.msra.mxu0 %v351
      %369 = vmatprep.subr.mxu0 0.0
      %370 = vmatpush1.xpose.msra.mxu0 %v353
      %371 = vmatprep.subr.mxu0 0.0
      %372 = vmatpush1.xpose.msra.mxu0 %v355
      %373 = vmatprep.subr.mxu0 0.0
      %374 = vmatpush1.xpose.msra.mxu0 %v357
      %375 = vmatprep.subr.mxu0 0.0
      %376 = vmatpush1.xpose.msra.mxu0 0.0
      %377 = vmatprep.subr.mxu0 0.0
      %378 = vmatpush1.xpose.msra.mxu0 0.0
      %379 = vmatprep.subr.mxu0 0.0
      %380 = vmatpush1.xpose.msra.mxu0 0.0
      %381 = vmatprep.subr.mxu0 0.0
      %382 = vmatpush1.xpose.msra.mxu0 0.0
      %383 = vmatprep.subr.mxu0 0.0
      %384 = vmatpush1.xpose.msra.mxu0 0.0
      %385 = vmatprep.subr.mxu0 0.0
      %386 = vmatpush1.xpose.msra.mxu0 0.0
      %387 = vmatprep.subr.mxu0 0.0
      %388 = vmatpush1.xpose.msra.mxu0 0.0
      %389 = vmatprep.subr.mxu0 0.0
      %390 = vmatpush1.xpose.msra.mxu0 0.0
      %391 = vmatprep.subr.mxu0 0.0
      %392 = vmatpush1.xpose.msra.mxu0 0.0
      %393 = vmatprep.subr.mxu0 0.0
      %394 = vmatpush1.xpose.msra.mxu0 0.0
      %395 = vmatprep.subr.mxu0 0.0
      %396 = vmatpush1.xpose.msra.mxu0 0.0
      %397 = vmatprep.subr.mxu0 0.0
      %398 = vmatpush1.xpose.msra.mxu0 0.0
      %399 = vmatprep.subr.mxu0 0.0
      %400 = vmatpush1.xpose.msra.mxu0 0.0
      %401 = vmatprep.subr.mxu0 0.0
      %402 = vmatpush1.xpose.msra.mxu0 0.0
      %403 = vmatprep.subr.mxu0 0.0
      %404 = vmatpush1.xpose.msra.mxu0 0.0
      %405 = vmatprep.subr.mxu0 0.0
      %406 = vmatpush1.xpose.msra.mxu0 0.0
      %407 = vmatprep.subr.mxu0 0.0
      %408 = vmatpush1.xpose.msra.mxu0 0.0
      %409 = vmatprep.subr.mxu0 0.0
      %410 = vmatpush1.xpose.msra.mxu0 0.0
      %411 = vmatprep.subr.mxu0 0.0
      %412 = vmatpush1.xpose.msra.mxu0 0.0
      %413 = vmatprep.subr.mxu0 0.0
      %414 = vmatpush1.xpose.msra.mxu0 0.0
      %415 = vmatprep.subr.mxu0 0.0
      %416 = vmatpush1.xpose.msra.mxu0 0.0
      %417 = vmatprep.subr.mxu0 0.0
      %418 = vmatpush1.xpose.msra.mxu0 0.0
      %419 = vmatprep.subr.mxu0 0.0
      %420 = vmatpush1.xpose.msra.mxu0 0.0
      %421 = vmatprep.subr.mxu0 0.0
      %422 = vmatpush1.xpose.msra.mxu0 0.0
      %423 = vmatprep.mubr.f32.mxu0 0.0
      %424 = vmatmul.mubr.f32.gmra.mrb[0].mxu0 %v320
      %v425 = vpop.f32.mrb[0].mxu0
      %v426 = vadd.f32 0.0, %v425
      %v427 = vpop.f32.mrb[0].mxu0
      %428 = vmatprep.mubr.f32.mxu0 0.0
      %429 = vmatmul.mubr.f32.gmra.mrb[0].mxu0 %v323
      %v430 = vpop.f32.mrb[0].mxu0
      %v431 = vadd.f32 0.0, %v430
      %v432 = vpop.f32.mrb[0].mxu0
      %433 = vmatprep.mubr.f32.mxu0 0.0
      %434 = vmatmul.mubr.f32.gmra.mrb[0].mxu0 %v326
      %v435 = vpop.f32.mrb[0].mxu0
      %v436 = vadd.f32 0.0, %v435
      %v437 = vpop.f32.mrb[0].mxu0
      %438 = vmatprep.mubr.f32.mxu0 0.0
      %439 = vmatmul.mubr.f32.gmra.mrb[0].mxu0 %v329
      %v440 = vpop.f32.mrb[0].mxu0
      %v441 = vadd.f32 0.0, %v440
      %v442 = vpop.f32.mrb[0].mxu0
      %443 = vmatprep.mubr.f32.mxu0 0.0
      %444 = vmatmul.mubr.f32.gmra.mrb[0].mxu0 %v332
      %v445 = vpop.f32.mrb[0].mxu0
      %v446 = vadd.f32 0.0, %v445
      %v447 = vpop.f32.mrb[0].mxu0
      %448 = vmatprep.mubr.f32.mxu0 0.0
      %449 = vmatmul.mubr.f32.gmra.mrb[0].mxu0 %v335
      %v450 = vpop.f32.mrb[0].mxu0
      %v451 = vadd.f32 0.0, %v450
      %v452 = vpop.f32.mrb[0].mxu0
      %453 = vmatprep.mubr.f32.mxu0 0.0
      %454 = vmatmul.mubr.f32.gmra.mrb[0].mxu0 %v338
      %v455 = vpop.f32.mrb[0].mxu0
      %v456 = vadd.f32 0.0, %v455
      %v457 = vpop.f32.mrb[0].mxu0
      %458 = vmatprep.mubr.f32.mxu0 0.0
      %459 = vmatmul.mubr.f32.gmra.mrb[0].mxu0 %v341
      %v460 = vpop.f32.mrb[0].mxu0
      %v461 = vadd.f32 0.0, %v460
      %v462 = vpop.f32.mrb[0].mxu0
      %463 = vdwg.mxu0
      %vm464 = vcmask 523264
      %v465 = vsel %vm464, %v426, -inf
      %466 = vmax.xlane.f32.xlu0 %v465
      %v467 = vpop.xlane.xlu0 %466
      %v468 = vsel %vm464, %v431, -inf
      %469 = vmax.xlane.f32.xlu0 %v468
      %v470 = vpop.xlane.xlu0 %469
      %v471 = vsel %vm464, %v436, -inf
      %472 = vmax.xlane.f32.xlu0 %v471
      %v473 = vpop.xlane.xlu0 %472
      %v474 = vsel %vm464, %v441, -inf
      %475 = vmax.xlane.f32.xlu0 %v474
      %v476 = vpop.xlane.xlu0 %475
      %v477 = vsel %vm464, %v446, -inf
      %478 = vmax.xlane.f32.xlu0 %v477
      %v479 = vpop.xlane.xlu0 %478
      %v480 = vsel %vm464, %v451, -inf
      %481 = vmax.xlane.f32.xlu0 %v480
      %v482 = vpop.xlane.xlu0 %481
      %v483 = vsel %vm464, %v456, -inf
      %484 = vmax.xlane.f32.xlu0 %v483
      %v485 = vpop.xlane.xlu0 %484
      %v486 = vsel %vm464, %v461, -inf
      %487 = vmax.xlane.f32.xlu0 %v486
      %v488 = vpop.xlane.xlu0 %487
      %v489 = vsub.f32 %v426, %v467
      %v490 = vsub.f32 %v431, %v470
      %v491 = vsub.f32 %v436, %v473
      %v492 = vsub.f32 %v441, %v476
      %v493 = vsub.f32 %v446, %v479
      %v494 = vsub.f32 %v451, %v482
      %v495 = vsub.f32 %v456, %v485
      %v496 = vsub.f32 %v461, %v488
      %v497 = vmul.f32 %v489, 1.442695
      %v498 = vpow.pop %v497
      %v499 = vmul.f32 %v490, 1.442695
      %v500 = vpow.pop %v499
      %v501 = vmul.f32 %v491, 1.442695
      %v502 = vpow.pop %v501
      %v503 = vmul.f32 %v492, 1.442695
      %v504 = vpow.pop %v503
      %v505 = vmul.f32 %v493, 1.442695
      %v506 = vpow.pop %v505
      %v507 = vmul.f32 %v494, 1.442695
      %v508 = vpow.pop %v507
      %v509 = vmul.f32 %v495, 1.442695
      %v510 = vpow.pop %v509
      %v511 = vmul.f32 %v496, 1.442695
      %v512 = vpow.pop %v511
      %v513 = vsel %vm464, %v498, 0.0
      %514 = vadd.xlane.f32.xlu0 %v513
      %v515 = vpop.xlane.xlu0 %514
      %v516 = vsel %vm464, %v500, 0.0
      %517 = vadd.xlane.f32.xlu0 %v516
      %v518 = vpop.xlane.xlu0 %517
      %v519 = vsel %vm464, %v502, 0.0
      %520 = vadd.xlane.f32.xlu0 %v519
      %v521 = vpop.xlane.xlu0 %520
      %v522 = vsel %vm464, %v504, 0.0
      %523 = vadd.xlane.f32.xlu0 %v522
      %v524 = vpop.xlane.xlu0 %523
      %v525 = vsel %vm464, %v506, 0.0
      %526 = vadd.xlane.f32.xlu0 %v525
      %v527 = vpop.xlane.xlu0 %526
      %v528 = vsel %vm464, %v508, 0.0
      %529 = vadd.xlane.f32.xlu0 %v528
      %v530 = vpop.xlane.xlu0 %529
      %v531 = vsel %vm464, %v510, 0.0
      %532 = vadd.xlane.f32.xlu0 %v531
      %v533 = vpop.xlane.xlu0 %532
      %v534 = vsel %vm464, %v512, 0.0
      %535 = vadd.xlane.f32.xlu0 %v534
      %v536 = vpop.xlane.xlu0 %535
      %537 = vrot.lane.b32.xlu0 %v248, 64
      %v538 = vpop.permute.xlu0 %537
      %539 = vrot.lane.b32.xlu0 %v253, 64
      %v540 = vpop.permute.xlu0 %539
      %541 = vrot.lane.b32.xlu0 %v258, 64
      %v542 = vpop.permute.xlu0 %541
      %543 = vrot.lane.b32.xlu0 %v263, 64
      %v544 = vpop.permute.xlu0 %543
      %545 = vrot.lane.b32.xlu0 %v268, 64
      %v546 = vpop.permute.xlu0 %545
      %547 = vrot.lane.b32.xlu0 %v273, 64
      %v548 = vpop.permute.xlu0 %547
      %549 = vrot.lane.b32.xlu0 %v278, 64
      %v550 = vpop.permute.xlu0 %549
      %551 = vrot.lane.b32.xlu0 %v283, 64
      %v552 = vpop.permute.xlu0 %551
      %v562 = vsel %vm464, %v498, 0
      %v565 = vsel %vm464, %v500, 0
      %v568 = vsel %vm464, %v502, 0
      %v571 = vsel %vm464, %v504, 0
      %v574 = vsel %vm464, %v506, 0
      %v577 = vsel %vm464, %v508, 0
      %v580 = vsel %vm464, %v510, 0
      %v583 = vsel %vm464, %v512, 0
      %585 = vmatprep.subr.mxu0 0.0
      %586 = vmatpush1.msra.mxu0 %v538
      %587 = vmatprep.subr.mxu0 0.0
      %588 = vmatpush1.msra.mxu0 %v540
      %589 = vmatprep.subr.mxu0 0.0
      %590 = vmatpush1.msra.mxu0 %v542
      %591 = vmatprep.subr.mxu0 0.0
      %592 = vmatpush1.msra.mxu0 %v544
      %593 = vmatprep.subr.mxu0 0.0
      %594 = vmatpush1.msra.mxu0 %v546
      %595 = vmatprep.subr.mxu0 0.0
      %596 = vmatpush1.msra.mxu0 %v548
      %597 = vmatprep.subr.mxu0 0.0
      %598 = vmatpush1.msra.mxu0 %v550
      %599 = vmatprep.subr.mxu0 0.0
      %600 = vmatpush1.msra.mxu0 %v552
      %601 = vmatprep.subr.mxu0 0.0
      %602 = vmatpush1.msra.mxu0 0.0
      %603 = vmatprep.subr.mxu0 0.0
      %604 = vmatpush1.msra.mxu0 0.0
      %605 = vmatprep.subr.mxu0 0.0
      %606 = vmatpush1.msra.mxu0 0.0
      %607 = vmatprep.subr.mxu0 0.0
      %608 = vmatpush1.msra.mxu0 0.0
      %609 = vmatprep.subr.mxu0 0.0
      %610 = vmatpush1.msra.mxu0 0.0
      %611 = vmatprep.subr.mxu0 0.0
      %612 = vmatpush1.msra.mxu0 0.0
      %613 = vmatprep.subr.mxu0 0.0
      %614 = vmatpush1.msra.mxu0 0.0
      %615 = vmatprep.subr.mxu0 0.0
      %616 = vmatpush1.msra.mxu0 0.0
      %617 = vmatprep.subr.mxu0 0.0
      %618 = vmatpush1.msra.mxu0 0.0
      %619 = vmatprep.subr.mxu0 0.0
      %620 = vmatpush1.msra.mxu0 0.0
      %621 = vmatprep.subr.mxu0 0.0
      %622 = vmatpush1.msra.mxu0 0.0
      %623 = vmatprep.subr.mxu0 0.0
      %624 = vmatpush1.msra.mxu0 0.0
      %625 = vmatprep.subr.mxu0 0.0
      %626 = vmatpush1.msra.mxu0 0.0
      %627 = vmatprep.subr.mxu0 0.0
      %628 = vmatpush1.msra.mxu0 0.0
      %629 = vmatprep.subr.mxu0 0.0
      %630 = vmatpush1.msra.mxu0 0.0
      %631 = vmatprep.subr.mxu0 0.0
      %632 = vmatpush1.msra.mxu0 0.0
      %633 = vmatprep.subr.mxu0 0.0
      %634 = vmatpush1.msra.mxu0 0.0
      %635 = vmatprep.subr.mxu0 0.0
      %636 = vmatpush1.msra.mxu0 0.0
      %637 = vmatprep.subr.mxu0 0.0
      %638 = vmatpush1.msra.mxu0 0.0
      %639 = vmatprep.subr.mxu0 0.0
      %640 = vmatpush1.msra.mxu0 0.0
      %641 = vmatprep.subr.mxu0 0.0
      %642 = vmatpush1.msra.mxu0 0.0
      %643 = vmatprep.subr.mxu0 0.0
      %644 = vmatpush1.msra.mxu0 0.0
      %645 = vmatprep.subr.mxu0 0.0
      %646 = vmatpush1.msra.mxu0 0.0
      %647 = vmatprep.subr.mxu0 0.0
      %648 = vmatpush1.msra.mxu0 0.0
      %649 = vmatprep.mubr.f32.mxu0 0.0
      %650 = vmatmul.mubr.f32.gmra.mrb[0].mxu0 %v562
      %v651 = vpop.f32.mrb[0].mxu0
      %v652 = vadd.f32 0.0, %v651
      %v653 = vpop.f32.mrb[0].mxu0
      %654 = vmatprep.mubr.f32.mxu0 0.0
      %655 = vmatmul.mubr.f32.gmra.mrb[0].mxu0 %v565
      %v656 = vpop.f32.mrb[0].mxu0
      %v657 = vadd.f32 0.0, %v656
      %v658 = vpop.f32.mrb[0].mxu0
      %659 = vmatprep.mubr.f32.mxu0 0.0
      %660 = vmatmul.mubr.f32.gmra.mrb[0].mxu0 %v568
      %v661 = vpop.f32.mrb[0].mxu0
      %v662 = vadd.f32 0.0, %v661
      %v663 = vpop.f32.mrb[0].mxu0
      %664 = vmatprep.mubr.f32.mxu0 0.0
      %665 = vmatmul.mubr.f32.gmra.mrb[0].mxu0 %v571
      %v666 = vpop.f32.mrb[0].mxu0
      %v667 = vadd.f32 0.0, %v666
      %v668 = vpop.f32.mrb[0].mxu0
      %669 = vmatprep.mubr.f32.mxu0 0.0
      %670 = vmatmul.mubr.f32.gmra.mrb[0].mxu0 %v574
      %v671 = vpop.f32.mrb[0].mxu0
      %v672 = vadd.f32 0.0, %v671
      %v673 = vpop.f32.mrb[0].mxu0
      %674 = vmatprep.mubr.f32.mxu0 0.0
      %675 = vmatmul.mubr.f32.gmra.mrb[0].mxu0 %v577
      %v676 = vpop.f32.mrb[0].mxu0
      %v677 = vadd.f32 0.0, %v676
      %v678 = vpop.f32.mrb[0].mxu0
      %679 = vmatprep.mubr.f32.mxu0 0.0
      %680 = vmatmul.mubr.f32.gmra.mrb[0].mxu0 %v580
      %v681 = vpop.f32.mrb[0].mxu0
      %v682 = vadd.f32 0.0, %v681
      %v683 = vpop.f32.mrb[0].mxu0
      %684 = vmatprep.mubr.f32.mxu0 0.0
      %685 = vmatmul.mubr.f32.gmra.mrb[0].mxu0 %v583
      %v686 = vpop.f32.mrb[0].mxu0
      %v687 = vadd.f32 0.0, %v686
      %v688 = vpop.f32.mrb[0].mxu0
      %689 = vdwg.mxu0
      %v690 = vrcp.pop %v515
      %v691 = vrcp.pop %v518
      %v692 = vrcp.pop %v521
      %v693 = vrcp.pop %v524
      %v694 = vrcp.pop %v527
      %v695 = vrcp.pop %v530
      %v696 = vrcp.pop %v533
      %v697 = vrcp.pop %v536
      %v698 = vmul.f32 %v515, %v690
      %v699 = vmul.f32 %v518, %v691
      %v700 = vmul.f32 %v521, %v692
      %v701 = vmul.f32 %v524, %v693
      %v702 = vmul.f32 %v527, %v694
      %v703 = vmul.f32 %v530, %v695
      %v704 = vmul.f32 %v533, %v696
      %v705 = vmul.f32 %v536, %v697
      %v706 = vsub.f32 2.0, %v698
      %v707 = vsub.f32 2.0, %v699
      %v708 = vsub.f32 2.0, %v700
      %v709 = vsub.f32 2.0, %v701
      %v710 = vsub.f32 2.0, %v702
      %v711 = vsub.f32 2.0, %v703
      %v712 = vsub.f32 2.0, %v704
      %v713 = vsub.f32 2.0, %v705
      %v714 = vmul.f32 %v690, %v706
      %v715 = vmul.f32 %v691, %v707
      %v716 = vmul.f32 %v692, %v708
      %v717 = vmul.f32 %v693, %v709
      %v718 = vmul.f32 %v694, %v710
      %v719 = vmul.f32 %v695, %v711
      %v720 = vmul.f32 %v696, %v712
      %v721 = vmul.f32 %v697, %v713
      %v722 = vmul.f32 %v652, %v714
      %v723 = vmul.f32 %v657, %v715
      %v724 = vmul.f32 %v662, %v716
      %v725 = vmul.f32 %v667, %v717
      %v726 = vmul.f32 %v672, %v718
      %v727 = vmul.f32 %v677, %v719
      %v728 = vmul.f32 %v682, %v720
      %v729 = vmul.f32 %v687, %v721
      %730 = vst.msk [vmem:[%s143] sm:$0xff] %vm318, %v722
      %731 = vst.msk [vmem:[%s143 + $0x8] sm:$0xff] %vm318, %v723
      %732 = vst.msk [vmem:[%s143 + $0x10] sm:$0xff] %vm318, %v724
      %733 = vst.msk [vmem:[%s143 + $0x18] sm:$0xff] %vm318, %v725
      %734 = vst.msk [vmem:[%s143 + $0x20] sm:$0xff] %vm318, %v726
      %735 = vst.msk [vmem:[%s143 + $0x28] sm:$0xff] %vm318, %v727
      %736 = vst.msk [vmem:[%s143 + $0x30] sm:$0xff] %vm318, %v728
      %737 = vst.msk [vmem:[%s143 + $0x38] sm:$0xff] %vm318, %v729
      %738 = vrot.lane.b32.xlu0 %v286, 112
      %v739 = vpop.permute.xlu0 %738
      %740 = vrot.lane.b32.xlu0 %v287, 112
      %v741 = vpop.permute.xlu0 %740
      %742 = vrot.lane.b32.xlu0 %v288, 112
      %v743 = vpop.permute.xlu0 %742
      %744 = vrot.lane.b32.xlu0 %v289, 112
      %v745 = vpop.permute.xlu0 %744
      %746 = vrot.lane.b32.xlu0 %v290, 112
      %v747 = vpop.permute.xlu0 %746
      %748 = vrot.lane.b32.xlu0 %v291, 112
      %v749 = vpop.permute.xlu0 %748
      %750 = vrot.lane.b32.xlu0 %v292, 112
      %v751 = vpop.permute.xlu0 %750
      %752 = vrot.lane.b32.xlu0 %v293, 112
      %v753 = vpop.permute.xlu0 %752
      %754 = vrot.lane.b32.xlu0 %v248, 80
      %v755 = vpop.permute.xlu0 %754
      %756 = vrot.lane.b32.xlu0 %v253, 80
      %v757 = vpop.permute.xlu0 %756
      %758 = vrot.lane.b32.xlu0 %v258, 80
      %v759 = vpop.permute.xlu0 %758
      %760 = vrot.lane.b32.xlu0 %v263, 80
      %v761 = vpop.permute.xlu0 %760
      %762 = vrot.lane.b32.xlu0 %v268, 80
      %v763 = vpop.permute.xlu0 %762
      %764 = vrot.lane.b32.xlu0 %v273, 80
      %v765 = vpop.permute.xlu0 %764
      %766 = vrot.lane.b32.xlu0 %v278, 80
      %v767 = vpop.permute.xlu0 %766
      %768 = vrot.lane.b32.xlu0 %v283, 80
      %v769 = vpop.permute.xlu0 %768
      %v770 = vsel %vm318, %v739, 0
      %v772 = vsel %vm318, %v741, 0
      %v774 = vsel %vm318, %v743, 0
      %v776 = vsel %vm318, %v745, 0
      %v778 = vsel %vm318, %v747, 0
      %v780 = vsel %vm318, %v749, 0
      %v782 = vsel %vm318, %v751, 0
      %v784 = vsel %vm318, %v753, 0
      %v786 = vsel %vm318, %v755, 0
      %v788 = vsel %vm318, %v757, 0
      %v790 = vsel %vm318, %v759, 0
      %v792 = vsel %vm318, %v761, 0
      %v794 = vsel %vm318, %v763, 0
      %v796 = vsel %vm318, %v765, 0
      %v798 = vsel %vm318, %v767, 0
      %v800 = vsel %vm318, %v769, 0
      %802 = vmatprep.subr.mxu0 0.0
      %803 = vmatpush1.xpose.msra.mxu0 %v786
      %804 = vmatprep.subr.mxu0 0.0
      %805 = vmatpush1.xpose.msra.mxu0 %v788
      %806 = vmatprep.subr.mxu0 0.0
      %807 = vmatpush1.xpose.msra.mxu0 %v790
      %808 = vmatprep.subr.mxu0 0.0
      %809 = vmatpush1.xpose.msra.mxu0 %v792
      %810 = vmatprep.subr.mxu0 0.0
      %811 = vmatpush1.xpose.msra.mxu0 %v794
      %812 = vmatprep.subr.mxu0 0.0
      %813 = vmatpush1.xpose.msra.mxu0 %v796
      %814 = vmatprep.subr.mxu0 0.0
      %815 = vmatpush1.xpose.msra.mxu0 %v798
      %816 = vmatprep.subr.mxu0 0.0
      %817 = vmatpush1.xpose.msra.mxu0 %v800
      %818 = vmatprep.subr.mxu0 0.0
      %819 = vmatpush1.xpose.msra.mxu0 0.0
      %820 = vmatprep.subr.mxu0 0.0
      %821 = vmatpush1.xpose.msra.mxu0 0.0
      %822 = vmatprep.subr.mxu0 0.0
      %823 = vmatpush1.xpose.msra.mxu0 0.0
      %824 = vmatprep.subr.mxu0 0.0
      %825 = vmatpush1.xpose.msra.mxu0 0.0
      %826 = vmatprep.subr.mxu0 0.0
      %827 = vmatpush1.xpose.msra.mxu0 0.0
      %828 = vmatprep.subr.mxu0 0.0
      %829 = vmatpush1.xpose.msra.mxu0 0.0
      %830 = vmatprep.subr.mxu0 0.0
      %831 = vmatpush1.xpose.msra.mxu0 0.0
      %832 = vmatprep.subr.mxu0 0.0
      %833 = vmatpush1.xpose.msra.mxu0 0.0
      %834 = vmatprep.subr.mxu0 0.0
      %835 = vmatpush1.xpose.msra.mxu0 0.0
      %836 = vmatprep.subr.mxu0 0.0
      %837 = vmatpush1.xpose.msra.mxu0 0.0
      %838 = vmatprep.subr.mxu0 0.0
      %839 = vmatpush1.xpose.msra.mxu0 0.0
      %840 = vmatprep.subr.mxu0 0.0
      %841 = vmatpush1.xpose.msra.mxu0 0.0
      %842 = vmatprep.subr.mxu0 0.0
      %843 = vmatpush1.xpose.msra.mxu0 0.0
      %844 = vmatprep.subr.mxu0 0.0
      %845 = vmatpush1.xpose.msra.mxu0 0.0
      %846 = vmatprep.subr.mxu0 0.0
      %847 = vmatpush1.xpose.msra.mxu0 0.0
      %848 = vmatprep.subr.mxu0 0.0
      %849 = vmatpush1.xpose.msra.mxu0 0.0
      %850 = vmatprep.subr.mxu0 0.0
      %851 = vmatpush1.xpose.msra.mxu0 0.0
      %852 = vmatprep.subr.mxu0 0.0
      %853 = vmatpush1.xpose.msra.mxu0 0.0
      %854 = vmatprep.subr.mxu0 0.0
      %855 = vmatpush1.xpose.msra.mxu0 0.0
      %856 = vmatprep.subr.mxu0 0.0
      %857 = vmatpush1.xpose.msra.mxu0 0.0
      %858 = vmatprep.subr.mxu0 0.0
      %859 = vmatpush1.xpose.msra.mxu0 0.0
      %860 = vmatprep.subr.mxu0 0.0
      %861 = vmatpush1.xpose.msra.mxu0 0.0
      %862 = vmatprep.subr.mxu0 0.0
      %863 = vmatpush1.xpose.msra.mxu0 0.0
      %864 = vmatprep.subr.mxu0 0.0
      %865 = vmatpush1.xpose.msra.mxu0 0.0
      %866 = vmatprep.mubr.f32.mxu0 0.0
      %867 = vmatmul.mubr.f32.gmra.mrb[0].mxu0 %v770
      %v868 = vpop.f32.mrb[0].mxu0
      %v869 = vadd.f32 0.0, %v868
      %v870 = vpop.f32.mrb[0].mxu0
      %871 = vmatprep.mubr.f32.mxu0 0.0
      %872 = vmatmul.mubr.f32.gmra.mrb[0].mxu0 %v772
      %v873 = vpop.f32.mrb[0].mxu0
      %v874 = vadd.f32 0.0, %v873
      %v875 = vpop.f32.mrb[0].mxu0
      %876 = vmatprep.mubr.f32.mxu0 0.0
      %877 = vmatmul.mubr.f32.gmra.mrb[0].mxu0 %v774
      %v878 = vpop.f32.mrb[0].mxu0
      %v879 = vadd.f32 0.0, %v878
      %v880 = vpop.f32.mrb[0].mxu0
      %881 = vmatprep.mubr.f32.mxu0 0.0
      %882 = vmatmul.mubr.f32.gmra.mrb[0].mxu0 %v776
      %v883 = vpop.f32.mrb[0].mxu0
      %v884 = vadd.f32 0.0, %v883
      %v885 = vpop.f32.mrb[0].mxu0
      %886 = vmatprep.mubr.f32.mxu0 0.0
      %887 = vmatmul.mubr.f32.gmra.mrb[0].mxu0 %v778
      %v888 = vpop.f32.mrb[0].mxu0
      %v889 = vadd.f32 0.0, %v888
      %v890 = vpop.f32.mrb[0].mxu0
      %891 = vmatprep.mubr.f32.mxu0 0.0
      %892 = vmatmul.mubr.f32.gmra.mrb[0].mxu0 %v780
      %v893 = vpop.f32.mrb[0].mxu0
      %v894 = vadd.f32 0.0, %v893
      %v895 = vpop.f32.mrb[0].mxu0
      %896 = vmatprep.mubr.f32.mxu0 0.0
      %897 = vmatmul.mubr.f32.gmra.mrb[0].mxu0 %v782
      %v898 = vpop.f32.mrb[0].mxu0
      %v899 = vadd.f32 0.0, %v898
      %v900 = vpop.f32.mrb[0].mxu0
      %901 = vmatprep.mubr.f32.mxu0 0.0
      %902 = vmatmul.mubr.f32.gmra.mrb[0].mxu0 %v784
      %v903 = vpop.f32.mrb[0].mxu0
      %v904 = vadd.f32 0.0, %v903
      %v905 = vpop.f32.mrb[0].mxu0
      %906 = vdwg.mxu0
      %v907 = vsel %vm464, %v869, -inf
      %908 = vmax.xlane.f32.xlu0 %v907
      %v909 = vpop.xlane.xlu0 %908
      %v910 = vsel %vm464, %v874, -inf
      %911 = vmax.xlane.f32.xlu0 %v910
      %v912 = vpop.xlane.xlu0 %911
      %v913 = vsel %vm464, %v879, -inf
      %914 = vmax.xlane.f32.xlu0 %v913
      %v915 = vpop.xlane.xlu0 %914
      %v916 = vsel %vm464, %v884, -inf
      %917 = vmax.xlane.f32.xlu0 %v916
      %v918 = vpop.xlane.xlu0 %917
      %v919 = vsel %vm464, %v889, -inf
      %920 = vmax.xlane.f32.xlu0 %v919
      %v921 = vpop.xlane.xlu0 %920
      %v922 = vsel %vm464, %v894, -inf
      %923 = vmax.xlane.f32.xlu0 %v922
      %v924 = vpop.xlane.xlu0 %923
      %v925 = vsel %vm464, %v899, -inf
      %926 = vmax.xlane.f32.xlu0 %v925
      %v927 = vpop.xlane.xlu0 %926
      %v928 = vsel %vm464, %v904, -inf
      %929 = vmax.xlane.f32.xlu0 %v928
      %v930 = vpop.xlane.xlu0 %929
      %v931 = vsub.f32 %v869, %v909
      %v932 = vsub.f32 %v874, %v912
      %v933 = vsub.f32 %v879, %v915
      %v934 = vsub.f32 %v884, %v918
      %v935 = vsub.f32 %v889, %v921
      %v936 = vsub.f32 %v894, %v924
      %v937 = vsub.f32 %v899, %v927
      %v938 = vsub.f32 %v904, %v930
      %v939 = vmul.f32 %v931, 1.442695
      %v940 = vpow.pop %v939
      %v941 = vmul.f32 %v932, 1.442695
      %v942 = vpow.pop %v941
      %v943 = vmul.f32 %v933, 1.442695
      %v944 = vpow.pop %v943
      %v945 = vmul.f32 %v934, 1.442695
      %v946 = vpow.pop %v945
      %v947 = vmul.f32 %v935, 1.442695
      %v948 = vpow.pop %v947
      %v949 = vmul.f32 %v936, 1.442695
      %v950 = vpow.pop %v949
      %v951 = vmul.f32 %v937, 1.442695
      %v952 = vpow.pop %v951
      %v953 = vmul.f32 %v938, 1.442695
      %v954 = vpow.pop %v953
      %v955 = vsel %vm464, %v940, 0.0
      %956 = vadd.xlane.f32.xlu0 %v955
      %v957 = vpop.xlane.xlu0 %956
      %v958 = vsel %vm464, %v942, 0.0
      %959 = vadd.xlane.f32.xlu0 %v958
      %v960 = vpop.xlane.xlu0 %959
      %v961 = vsel %vm464, %v944, 0.0
      %962 = vadd.xlane.f32.xlu0 %v961
      %v963 = vpop.xlane.xlu0 %962
      %v964 = vsel %vm464, %v946, 0.0
      %965 = vadd.xlane.f32.xlu0 %v964
      %v966 = vpop.xlane.xlu0 %965
      %v967 = vsel %vm464, %v948, 0.0
      %968 = vadd.xlane.f32.xlu0 %v967
      %v969 = vpop.xlane.xlu0 %968
      %v970 = vsel %vm464, %v950, 0.0
      %971 = vadd.xlane.f32.xlu0 %v970
      %v972 = vpop.xlane.xlu0 %971
      %v973 = vsel %vm464, %v952, 0.0
      %974 = vadd.xlane.f32.xlu0 %v973
      %v975 = vpop.xlane.xlu0 %974
      %v976 = vsel %vm464, %v954, 0.0
      %977 = vadd.xlane.f32.xlu0 %v976
      %v978 = vpop.xlane.xlu0 %977
      %979 = vrot.lane.b32.xlu0 %v248, 48
      %v980 = vpop.permute.xlu0 %979
      %981 = vrot.lane.b32.xlu0 %v253, 48
      %v982 = vpop.permute.xlu0 %981
      %983 = vrot.lane.b32.xlu0 %v258, 48
      %v984 = vpop.permute.xlu0 %983
      %985 = vrot.lane.b32.xlu0 %v263, 48
      %v986 = vpop.permute.xlu0 %985
      %987 = vrot.lane.b32.xlu0 %v268, 48
      %v988 = vpop.permute.xlu0 %987
      %989 = vrot.lane.b32.xlu0 %v273, 48
      %v990 = vpop.permute.xlu0 %989
      %991 = vrot.lane.b32.xlu0 %v278, 48
      %v992 = vpop.permute.xlu0 %991
      %993 = vrot.lane.b32.xlu0 %v283, 48
      %v994 = vpop.permute.xlu0 %993
      %v1004 = vsel %vm464, %v940, 0
      %v1007 = vsel %vm464, %v942, 0
      %v1010 = vsel %vm464, %v944, 0
      %v1013 = vsel %vm464, %v946, 0
      %v1016 = vsel %vm464, %v948, 0
      %v1019 = vsel %vm464, %v950, 0
      %v1022 = vsel %vm464, %v952, 0
      %v1025 = vsel %vm464, %v954, 0
      %1027 = vmatprep.subr.mxu0 0.0
      %1028 = vmatpush1.msra.mxu0 %v980
      %1029 = vmatprep.subr.mxu0 0.0
      %1030 = vmatpush1.msra.mxu0 %v982
      %1031 = vmatprep.subr.mxu0 0.0
      %1032 = vmatpush1.msra.mxu0 %v984
      %1033 = vmatprep.subr.mxu0 0.0
      %1034 = vmatpush1.msra.mxu0 %v986
      %1035 = vmatprep.subr.mxu0 0.0
      %1036 = vmatpush1.msra.mxu0 %v988
      %1037 = vmatprep.subr.mxu0 0.0
      %1038 = vmatpush1.msra.mxu0 %v990
      %1039 = vmatprep.subr.mxu0 0.0
      %1040 = vmatpush1.msra.mxu0 %v992
      %1041 = vmatprep.subr.mxu0 0.0
      %1042 = vmatpush1.msra.mxu0 %v994
      %1043 = vmatprep.subr.mxu0 0.0
      %1044 = vmatpush1.msra.mxu0 0.0
      %1045 = vmatprep.subr.mxu0 0.0
      %1046 = vmatpush1.msra.mxu0 0.0
      %1047 = vmatprep.subr.mxu0 0.0
      %1048 = vmatpush1.msra.mxu0 0.0
      %1049 = vmatprep.subr.mxu0 0.0
      %1050 = vmatpush1.msra.mxu0 0.0
      %1051 = vmatprep.subr.mxu0 0.0
      %1052 = vmatpush1.msra.mxu0 0.0
      %1053 = vmatprep.subr.mxu0 0.0
      %1054 = vmatpush1.msra.mxu0 0.0
      %1055 = vmatprep.subr.mxu0 0.0
      %1056 = vmatpush1.msra.mxu0 0.0
      %1057 = vmatprep.subr.mxu0 0.0
      %1058 = vmatpush1.msra.mxu0 0.0
      %1059 = vmatprep.subr.mxu0 0.0
      %1060 = vmatpush1.msra.mxu0 0.0
      %1061 = vmatprep.subr.mxu0 0.0
      %1062 = vmatpush1.msra.mxu0 0.0
      %1063 = vmatprep.subr.mxu0 0.0
      %1064 = vmatpush1.msra.mxu0 0.0
      %1065 = vmatprep.subr.mxu0 0.0
      %1066 = vmatpush1.msra.mxu0 0.0
      %1067 = vmatprep.subr.mxu0 0.0
      %1068 = vmatpush1.msra.mxu0 0.0
      %1069 = vmatprep.subr.mxu0 0.0
      %1070 = vmatpush1.msra.mxu0 0.0
      %1071 = vmatprep.subr.mxu0 0.0
      %1072 = vmatpush1.msra.mxu0 0.0
      %1073 = vmatprep.subr.mxu0 0.0
      %1074 = vmatpush1.msra.mxu0 0.0
      %1075 = vmatprep.subr.mxu0 0.0
      %1076 = vmatpush1.msra.mxu0 0.0
      %1077 = vmatprep.subr.mxu0 0.0
      %1078 = vmatpush1.msra.mxu0 0.0
      %1079 = vmatprep.subr.mxu0 0.0
      %1080 = vmatpush1.msra.mxu0 0.0
      %1081 = vmatprep.subr.mxu0 0.0
      %1082 = vmatpush1.msra.mxu0 0.0
      %1083 = vmatprep.subr.mxu0 0.0
      %1084 = vmatpush1.msra.mxu0 0.0
      %1085 = vmatprep.subr.mxu0 0.0
      %1086 = vmatpush1.msra.mxu0 0.0
      %1087 = vmatprep.subr.mxu0 0.0
      %1088 = vmatpush1.msra.mxu0 0.0
      %1089 = vmatprep.subr.mxu0 0.0
      %1090 = vmatpush1.msra.mxu0 0.0
      %1091 = vmatprep.mubr.f32.mxu0 0.0
      %1092 = vmatmul.mubr.f32.gmra.mrb[0].mxu0 %v1004
      %v1093 = vpop.f32.mrb[0].mxu0
      %v1094 = vadd.f32 0.0, %v1093
      %v1095 = vpop.f32.mrb[0].mxu0
      %1096 = vmatprep.mubr.f32.mxu0 0.0
      %1097 = vmatmul.mubr.f32.gmra.mrb[0].mxu0 %v1007
      %v1098 = vpop.f32.mrb[0].mxu0
      %v1099 = vadd.f32 0.0, %v1098
      %v1100 = vpop.f32.mrb[0].mxu0
      %1101 = vmatprep.mubr.f32.mxu0 0.0
      %1102 = vmatmul.mubr.f32.gmra.mrb[0].mxu0 %v1010
      %v1103 = vpop.f32.mrb[0].mxu0
      %v1104 = vadd.f32 0.0, %v1103
      %v1105 = vpop.f32.mrb[0].mxu0
      %1106 = vmatprep.mubr.f32.mxu0 0.0
      %1107 = vmatmul.mubr.f32.gmra.mrb[0].mxu0 %v1013
      %v1108 = vpop.f32.mrb[0].mxu0
      %v1109 = vadd.f32 0.0, %v1108
      %v1110 = vpop.f32.mrb[0].mxu0
      %1111 = vmatprep.mubr.f32.mxu0 0.0
      %1112 = vmatmul.mubr.f32.gmra.mrb[0].mxu0 %v1016
      %v1113 = vpop.f32.mrb[0].mxu0
      %v1114 = vadd.f32 0.0, %v1113
      %v1115 = vpop.f32.mrb[0].mxu0
      %1116 = vmatprep.mubr.f32.mxu0 0.0
      %1117 = vmatmul.mubr.f32.gmra.mrb[0].mxu0 %v1019
      %v1118 = vpop.f32.mrb[0].mxu0
      %v1119 = vadd.f32 0.0, %v1118
      %v1120 = vpop.f32.mrb[0].mxu0
      %1121 = vmatprep.mubr.f32.mxu0 0.0
      %1122 = vmatmul.mubr.f32.gmra.mrb[0].mxu0 %v1022
      %v1123 = vpop.f32.mrb[0].mxu0
      %v1124 = vadd.f32 0.0, %v1123
      %v1125 = vpop.f32.mrb[0].mxu0
      %1126 = vmatprep.mubr.f32.mxu0 0.0
      %1127 = vmatmul.mubr.f32.gmra.mrb[0].mxu0 %v1025
      %v1128 = vpop.f32.mrb[0].mxu0
      %v1129 = vadd.f32 0.0, %v1128
      %v1130 = vpop.f32.mrb[0].mxu0
      %1131 = vdwg.mxu0
      %v1132 = vrcp.pop %v957
      %v1133 = vrcp.pop %v960
      %v1134 = vrcp.pop %v963
      %v1135 = vrcp.pop %v966
      %v1136 = vrcp.pop %v969
      %v1137 = vrcp.pop %v972
      %v1138 = vrcp.pop %v975
      %v1139 = vrcp.pop %v978
      %v1140 = vmul.f32 %v957, %v1132
      %v1141 = vmul.f32 %v960, %v1133
      %v1142 = vmul.f32 %v963, %v1134
      %v1143 = vmul.f32 %v966, %v1135
      %v1144 = vmul.f32 %v969, %v1136
      %v1145 = vmul.f32 %v972, %v1137
      %v1146 = vmul.f32 %v975, %v1138
      %v1147 = vmul.f32 %v978, %v1139
      %v1148 = vsub.f32 2.0, %v1140
      %v1149 = vsub.f32 2.0, %v1141
      %v1150 = vsub.f32 2.0, %v1142
      %v1151 = vsub.f32 2.0, %v1143
      %v1152 = vsub.f32 2.0, %v1144
      %v1153 = vsub.f32 2.0, %v1145
      %v1154 = vsub.f32 2.0, %v1146
      %v1155 = vsub.f32 2.0, %v1147
      %v1156 = vmul.f32 %v1132, %v1148
      %v1157 = vmul.f32 %v1133, %v1149
      %v1158 = vmul.f32 %v1134, %v1150
      %v1159 = vmul.f32 %v1135, %v1151
      %v1160 = vmul.f32 %v1136, %v1152
      %v1161 = vmul.f32 %v1137, %v1153
      %v1162 = vmul.f32 %v1138, %v1154
      %v1163 = vmul.f32 %v1139, %v1155
      %v1164 = vmul.f32 %v1094, %v1156
      %v1165 = vmul.f32 %v1099, %v1157
      %v1166 = vmul.f32 %v1104, %v1158
      %v1167 = vmul.f32 %v1109, %v1159
      %v1168 = vmul.f32 %v1114, %v1160
      %v1169 = vmul.f32 %v1119, %v1161
      %v1170 = vmul.f32 %v1124, %v1162
      %v1171 = vmul.f32 %v1129, %v1163
      %1180 = vrot.lane.b32.xlu0 %v1164, 16
      %v1181 = vpop.permute.xlu0 %1180
      %1182 = vrot.lane.b32.xlu0 %v1165, 16
      %v1183 = vpop.permute.xlu0 %1182
      %1184 = vrot.lane.b32.xlu0 %v1166, 16
      %v1185 = vpop.permute.xlu0 %1184
      %1186 = vrot.lane.b32.xlu0 %v1167, 16
      %v1187 = vpop.permute.xlu0 %1186
      %1188 = vrot.lane.b32.xlu0 %v1168, 16
      %v1189 = vpop.permute.xlu0 %1188
      %1190 = vrot.lane.b32.xlu0 %v1169, 16
      %v1191 = vpop.permute.xlu0 %1190
      %1192 = vrot.lane.b32.xlu0 %v1170, 16
      %v1193 = vpop.permute.xlu0 %1192
      %1194 = vrot.lane.b32.xlu0 %v1171, 16
      %v1195 = vpop.permute.xlu0 %1194
      %vm1204 = vcmask 261248
      %1205 = vst.msk [vmem:[%s143] sm:$0xff] %vm1204, %v1181
      %1206 = vst.msk [vmem:[%s143 + $0x8] sm:$0xff] %vm1204, %v1183
      %1207 = vst.msk [vmem:[%s143 + $0x10] sm:$0xff] %vm1204, %v1185
      %1208 = vst.msk [vmem:[%s143 + $0x18] sm:$0xff] %vm1204, %v1187
      %1209 = vst.msk [vmem:[%s143 + $0x20] sm:$0xff] %vm1204, %v1189
      %1210 = vst.msk [vmem:[%s143 + $0x28] sm:$0xff] %vm1204, %v1191
      %1211 = vst.msk [vmem:[%s143 + $0x30] sm:$0xff] %vm1204, %v1193
      %1212 = vst.msk [vmem:[%s143 + $0x38] sm:$0xff] %vm1204, %v1195
      %p1213 = scmp.lt.s32.totalorder %s13, 1
      %s1214 = scalar_select %p1213, %s13, 1
      %s1215 = smul.addr %s1214, 8
      %s1216 = smul.addr %s1215, 8
      %s1217 = scalar_lea.vmem %s2, %s1216
      // Predicated region
      $region29: #{tpu_custom_call.1} parent=27 // pred_check
        %p1218 = pneg %p78
      $region30: #{tpu_custom_call.1} parent=27 // pred_check_branch
        %1220 = sbr.rel (%p1218) target = $region32
      $region31: #{tpu_custom_call.1} parent=27 // pred_region
        _
      $region32: #{tpu_custom_call.1} parent=27 // pred_fallthru
        _
    $region28: #{tpu_custom_call.1} parent=5 // pred_fallthru
      _
    %p1221 = scmp.le.s32.totalorder 2, %s8
    // Predicated region
    $region33: #{tpu_custom_call.1} parent=5 // pred_check
      %p1222 = pneg %p1221
    $region34: #{tpu_custom_call.1} parent=5 // pred_check_branch
      %1224 = sbr.rel (%p1222) target = $region36
    $region35: #{tpu_custom_call.1} parent=5 // pred_region
      %s1225 = ssub.s32 %s8, 2
      // Predicated region
      $region37: #{tpu_custom_call.1} parent=35 // pred_check
        %p1226 = pneg %p84
      $region38: #{tpu_custom_call.1} parent=35 // pred_check_branch
        %1228 = sbr.rel (%p1226) target = $region40
      $region39: #{tpu_custom_call.1} parent=35 // pred_region
        %p1229 = scmp.lt.s32.totalorder %s14, 1
        %s1230 = scalar_select %p1229, %s14, 1
        %s1231 = smul.addr %s1230, 8
        %s1232 = smul.addr %s1231, 8
        %s1233 = scalar_lea.vmem %s2, %s1232
      $region40: #{tpu_custom_call.1} parent=35 // pred_fallthru
        _
    $region36: #{tpu_custom_call.1} parent=5 // pred_fallthru
      _
  $region6: #{tpu_custom_call.1} parent=0 // loop_footer
    %s12 = sadd.s32 1, %s8
  $region7: #{tpu_custom_call.1} parent=0 // loop_footer_branch
    %7 = sbr.rel target = $region3
  $region8: #{tpu_custom_call.1} parent=0 // loop_exit
    _

</llo_original>
